<compile_context>
chip_gen: v5e
topology: v5e:2x2
jax: 0.10.0
libtpu: 0.0.40
codegen_flags: <defaults>
</compile_context>

<pallas_src>
import functools

import jax
import jax.numpy as jnp
from jax import lax
from jax.experimental import pallas as pl
from jax.experimental.pallas import tpu as pltpu


def mha_kernel(q_ref, k_ref, v_ref, wq_ref, wk_ref, wv_ref, wp_ref, bp_ref,
               o_ref, *, num_heads, d_head, masked):
    q = q_ref[...].astype(jnp.float32)          # (S, D)
    k = k_ref[...].astype(jnp.float32)
    v = v_ref[...].astype(jnp.float32)

    # Fused per-head projections: one full-width matmul per operand.
    # 1/sqrt(d_head) is already folded into wq_ref by the wrapper.
    Q = jnp.dot(q, wq_ref[...], preferred_element_type=jnp.float32)   # (S, H*dh)
    K = jnp.dot(k, wk_ref[...], preferred_element_type=jnp.float32)
    V = jnp.dot(v, wv_ref[...], preferred_element_type=jnp.float32)

    heads = []
    for h in range(num_heads):                   # static, small trip count
        lo = h * d_head
        qh = Q[:, lo:lo + d_head]                # static lane slices
        kh = K[:, lo:lo + d_head]
        vh = V[:, lo:lo + d_head]
        # Contract the feature axis directly (== Q @ K^T, no explicit transpose).
        scores = lax.dot_general(qh, kh, (((1,), (1,)), ((), ())),
                                 preferred_element_type=jnp.float32)  # (Sq, Sk)
        if masked:   # static flag; mirrors torch.triu(ones, diagonal=1) masking
            qi = lax.broadcasted_iota(jnp.int32, scores.shape, 0)
            ki = lax.broadcasted_iota(jnp.int32, scores.shape, 1)
            scores = jnp.where(ki > qi, -jnp.inf, scores)
        # softmax over dim=-2 (the query axis), exactly as the PyTorch module.
        m = jnp.max(scores, axis=-2, keepdims=True)
        e = jnp.exp(scores - m)
        sm = e * pl.reciprocal(jnp.sum(e, axis=-2, keepdims=True), approx=False)
        heads.append(jnp.dot(sm, vh, preferred_element_type=jnp.float32))

    # torch.cat(head_chunks, dim=-1) followed by a single output projection.
    cat = jnp.concatenate(heads, axis=-1)        # (S, D)
    out = jnp.dot(cat, wp_ref[...], preferred_element_type=jnp.float32) + bp_ref[...]
    o_ref[...] = out.astype(o_ref.dtype)


def multi_head_attention(q, k, v, wq, wk, wv, wp, bp, *, num_heads, masked=False):
    """q, k, v: (B, S, D). wq/wk/wv: (H, D, d_head) stored (in, out).
    wp: (D, D) stored (in, out). bp: (D,)."""
    B, S, D = q.shape
    H = num_heads
    d_head = D // H
    scale = 1.0 / (d_head ** 0.5)

    # Fuse per-head projection weights: (H, D, dh) -> (D, H*dh); head h occupies
    # columns [h*dh, (h+1)*dh), matching torch.cat(head_chunks, dim=-1).
    wq_all = jnp.transpose(wq, (1, 0, 2)).reshape(D, H * d_head) * scale
    wk_all = jnp.transpose(wk, (1, 0, 2)).reshape(D, H * d_head)
    wv_all = jnp.transpose(wv, (1, 0, 2)).reshape(D, H * d_head)
    bp2 = bp.reshape(1, D)

    kernel = functools.partial(mha_kernel, num_heads=H, d_head=d_head,
                               masked=masked)

    seq_spec = pl.BlockSpec((None, S, D), lambda b: (b, 0, 0))
    w_spec = pl.BlockSpec((D, H * d_head), lambda b: (0, 0))
    wp_spec = pl.BlockSpec((D, D), lambda b: (0, 0))
    bp_spec = pl.BlockSpec((1, D), lambda b: (0, 0))

    return pl.pallas_call(
        kernel,
        out_shape=jax.ShapeDtypeStruct((B, S, D), q.dtype),
        grid_spec=pltpu.PrefetchScalarGridSpec(
            num_scalar_prefetch=0,
            grid=(B,),
            in_specs=[seq_spec, seq_spec, seq_spec,
                      w_spec, w_spec, w_spec, wp_spec, bp_spec],
            out_specs=seq_spec,
        ),
        compiler_params=pltpu.CompilerParams(
            dimension_semantics=("parallel",)),   # v7x: shard batch across both TCs
    )(q, k, v, wq_all, wk_all, wv_all, wp, bp2)


def reference(q, k, v, wq, wk, wv, wp, bp, *, num_heads, d_head, masked=False):
    """Pure-JAX mirror of the PyTorch MultiHeadAttention forward."""
    outs = []
    for h in range(num_heads):
        Q = q @ wq[h]
        K = k @ wk[h]
        V = v @ wv[h]
        s = jnp.einsum('bqd,bkd->bqk', Q, K) / (d_head ** 0.5)
        if masked:
            S = Q.shape[-2]
            mask = jnp.triu(jnp.ones((S, S), bool), k=1)
            s = jnp.where(mask, -jnp.inf, s)
        s = jax.nn.softmax(s, axis=-2)
        outs.append(jnp.einsum('bqk,bkd->bqd', s, V))
    cat = jnp.concatenate(outs, axis=-1)
    return cat @ wp + bp


if __name__ == "__main__":
    num_heads = 4
    d_model = 32
    d_head = d_model // num_heads
    seq = 8
    batch = 2

    key = jax.random.PRNGKey(0)
    ks = jax.random.split(key, 8)

    q = jax.random.normal(ks[0], (batch, seq, d_model), jnp.float32)
    k = jax.random.normal(ks[1], (batch, seq, d_model), jnp.float32)
    v = jax.random.normal(ks[2], (batch, seq, d_model), jnp.float32)

    # Per-head q/k/v weights stacked: (H, D, d_head), stored (in, out).
    wq = jax.random.normal(ks[3], (num_heads, d_model, d_head), jnp.float32) * 0.1
    wk = jax.random.normal(ks[4], (num_heads, d_model, d_head), jnp.float32) * 0.1
    wv = jax.random.normal(ks[5], (num_heads, d_model, d_head), jnp.float32) * 0.1
    # Output projection Linear(d_model, d_model) with bias.
    wp = jax.random.normal(ks[6], (d_model, d_model), jnp.float32) * 0.1
    bp = jax.random.normal(ks[7], (d_model,), jnp.float32) * 0.1

    out = multi_head_attention(q, k, v, wq, wk, wv, wp, bp,
                               num_heads=num_heads, masked=False)
    out = jax.block_until_ready(out)

    ref = reference(q, k, v, wq, wk, wv, wp, bp,
                    num_heads=num_heads, d_head=d_head, masked=False)
    assert out.shape == (batch, seq, d_model)
    assert jnp.allclose(out, ref, atol=1e-4, rtol=1e-4), "mismatch vs JAX reference"

    print("KERNEL_OK")
</pallas_src>

<mosaic_0001>
module attributes {stable_mosaic.version = 11 : i64} {
  func.func @mha_kernel(%arg0: i32, %arg1: memref<1x8x32xf32, #tpu.memory_space<vmem>>, %arg2: memref<1x8x32xf32, #tpu.memory_space<vmem>>, %arg3: memref<1x8x32xf32, #tpu.memory_space<vmem>>, %arg4: memref<32x32xf32, #tpu.memory_space<vmem>>, %arg5: memref<32x32xf32, #tpu.memory_space<vmem>>, %arg6: memref<32x32xf32, #tpu.memory_space<vmem>>, %arg7: memref<32x32xf32, #tpu.memory_space<vmem>>, %arg8: memref<1x32xf32, #tpu.memory_space<vmem>>, %arg9: memref<1x8x32xf32, #tpu.memory_space<vmem>>) attributes {dimension_semantics = [#tpu.dimension_semantics<parallel>], iteration_bounds = array<i64: 2>, scalar_prefetch = 0 : i64, scratch_operands = 0 : i64, tpu.core_type = #tpu.core_type<tc>, window_params = [{transform_indices = @transform_0, window_bounds = array<i64: 1, 8, 32>}, {transform_indices = @transform_1, window_bounds = array<i64: 1, 8, 32>}, {transform_indices = @transform_2, window_bounds = array<i64: 1, 8, 32>}, {pipeline_mode = #tpu.pipeline_mode<synchronous>, transform_indices = @transform_3, window_bounds = array<i64: 32, 32>}, {pipeline_mode = #tpu.pipeline_mode<synchronous>, transform_indices = @transform_4, window_bounds = array<i64: 32, 32>}, {pipeline_mode = #tpu.pipeline_mode<synchronous>, transform_indices = @transform_5, window_bounds = array<i64: 32, 32>}, {pipeline_mode = #tpu.pipeline_mode<synchronous>, transform_indices = @transform_6, window_bounds = array<i64: 32, 32>}, {pipeline_mode = #tpu.pipeline_mode<synchronous>, transform_indices = @transform_7, window_bounds = array<i64: 1, 32>}, {transform_indices = @transform_8, window_bounds = array<i64: 1, 8, 32>}]} {
    %c0 = arith.constant 0 : index
    %c0_0 = arith.constant 0 : index
    %c0_1 = arith.constant 0 : index
    %0 = vector.load %arg1[%c0, %c0_0, %c0_1] : memref<1x8x32xf32, #tpu.memory_space<vmem>>, vector<1x8x32xf32>
    %1 = vector.shape_cast %0 : vector<1x8x32xf32> to vector<8x32xf32>
    %c0_2 = arith.constant 0 : index
    %c0_3 = arith.constant 0 : index
    %c0_4 = arith.constant 0 : index
    %2 = vector.load %arg2[%c0_2, %c0_3, %c0_4] : memref<1x8x32xf32, #tpu.memory_space<vmem>>, vector<1x8x32xf32>
    %3 = vector.shape_cast %2 : vector<1x8x32xf32> to vector<8x32xf32>
    %c0_5 = arith.constant 0 : index
    %c0_6 = arith.constant 0 : index
    %c0_7 = arith.constant 0 : index
    %4 = vector.load %arg3[%c0_5, %c0_6, %c0_7] : memref<1x8x32xf32, #tpu.memory_space<vmem>>, vector<1x8x32xf32>
    %5 = vector.shape_cast %4 : vector<1x8x32xf32> to vector<8x32xf32>
    %c0_8 = arith.constant 0 : index
    %c0_9 = arith.constant 0 : index
    %6 = vector.load %arg4[%c0_8, %c0_9] : memref<32x32xf32, #tpu.memory_space<vmem>>, vector<32x32xf32>
    %cst = arith.constant dense<0.000000e+00> : vector<8x32xf32>
    %7 = tpu.matmul %1, %6, %cst {dimension_numbers = #tpu.dot_dimension_numbers<[1], [0], [0], [1], [0, 0, 1, 1], [], []>} : vector<8x32xf32>, vector<32x32xf32>, vector<8x32xf32> -> vector<8x32xf32>
    %c0_10 = arith.constant 0 : index
    %c0_11 = arith.constant 0 : index
    %8 = vector.load %arg5[%c0_10, %c0_11] : memref<32x32xf32, #tpu.memory_space<vmem>>, vector<32x32xf32>
    %cst_12 = arith.constant dense<0.000000e+00> : vector<8x32xf32>
    %9 = tpu.matmul %3, %8, %cst_12 {dimension_numbers = #tpu.dot_dimension_numbers<[1], [0], [0], [1], [0, 0, 1, 1], [], []>} : vector<8x32xf32>, vector<32x32xf32>, vector<8x32xf32> -> vector<8x32xf32>
    %c0_13 = arith.constant 0 : index
    %c0_14 = arith.constant 0 : index
    %10 = vector.load %arg6[%c0_13, %c0_14] : memref<32x32xf32, #tpu.memory_space<vmem>>, vector<32x32xf32>
    %cst_15 = arith.constant dense<0.000000e+00> : vector<8x32xf32>
    %11 = tpu.matmul %5, %10, %cst_15 {dimension_numbers = #tpu.dot_dimension_numbers<[1], [0], [0], [1], [0, 0, 1, 1], [], []>} : vector<8x32xf32>, vector<32x32xf32>, vector<8x32xf32> -> vector<8x32xf32>
    %12 = vector.extract_strided_slice %7 {offsets = [0, 0], sizes = [8, 8], strides = [1, 1]} : vector<8x32xf32> to vector<8x8xf32>
    %13 = vector.extract_strided_slice %9 {offsets = [0, 0], sizes = [8, 8], strides = [1, 1]} : vector<8x32xf32> to vector<8x8xf32>
    %14 = vector.extract_strided_slice %11 {offsets = [0, 0], sizes = [8, 8], strides = [1, 1]} : vector<8x32xf32> to vector<8x8xf32>
    %cst_16 = arith.constant dense<0.000000e+00> : vector<8x8xf32>
    %15 = tpu.matmul %12, %13, %cst_16 {dimension_numbers = #tpu.dot_dimension_numbers<[1], [1], [0], [0], [0, 0, 1, 0], [], []>} : vector<8x8xf32>, vector<8x8xf32>, vector<8x8xf32> -> vector<8x8xf32>
    %cst_17 = arith.constant dense<0xFF800000> : vector<8xf32>
    %16 = vector.multi_reduction <maximumf>, %15, %cst_17 [0] : vector<8x8xf32> to vector<8xf32>
    %17 = vector.shape_cast %16 : vector<8xf32> to vector<1x8xf32>
    %18 = vector.broadcast %17 : vector<1x8xf32> to vector<8x8xf32>
    %19 = arith.subf %15, %18 : vector<8x8xf32>
    %20 = math.exp %19 : vector<8x8xf32>
    %cst_18 = arith.constant dense<0.000000e+00> : vector<8xf32>
    %21 = vector.multi_reduction <add>, %20, %cst_18 [0] : vector<8x8xf32> to vector<8xf32>
    %22 = vector.shape_cast %21 : vector<8xf32> to vector<1x8xf32>
    %23 = tpu.reciprocal %22 : vector<1x8xf32> -> vector<1x8xf32>
    %24 = vector.broadcast %23 : vector<1x8xf32> to vector<8x8xf32>
    %25 = arith.mulf %20, %24 : vector<8x8xf32>
    %cst_19 = arith.constant dense<0.000000e+00> : vector<8x8xf32>
    %26 = tpu.matmul %25, %14, %cst_19 {dimension_numbers = #tpu.dot_dimension_numbers<[1], [0], [0], [1], [0, 0, 1, 1], [], []>} : vector<8x8xf32>, vector<8x8xf32>, vector<8x8xf32> -> vector<8x8xf32>
    %27 = vector.extract_strided_slice %7 {offsets = [0, 8], sizes = [8, 8], strides = [1, 1]} : vector<8x32xf32> to vector<8x8xf32>
    %28 = vector.extract_strided_slice %9 {offsets = [0, 8], sizes = [8, 8], strides = [1, 1]} : vector<8x32xf32> to vector<8x8xf32>
    %29 = vector.extract_strided_slice %11 {offsets = [0, 8], sizes = [8, 8], strides = [1, 1]} : vector<8x32xf32> to vector<8x8xf32>
    %cst_20 = arith.constant dense<0.000000e+00> : vector<8x8xf32>
    %30 = tpu.matmul %27, %28, %cst_20 {dimension_numbers = #tpu.dot_dimension_numbers<[1], [1], [0], [0], [0, 0, 1, 0], [], []>} : vector<8x8xf32>, vector<8x8xf32>, vector<8x8xf32> -> vector<8x8xf32>
    %cst_21 = arith.constant dense<0xFF800000> : vector<8xf32>
    %31 = vector.multi_reduction <maximumf>, %30, %cst_21 [0] : vector<8x8xf32> to vector<8xf32>
    %32 = vector.shape_cast %31 : vector<8xf32> to vector<1x8xf32>
    %33 = vector.broadcast %32 : vector<1x8xf32> to vector<8x8xf32>
    %34 = arith.subf %30, %33 : vector<8x8xf32>
    %35 = math.exp %34 : vector<8x8xf32>
    %cst_22 = arith.constant dense<0.000000e+00> : vector<8xf32>
    %36 = vector.multi_reduction <add>, %35, %cst_22 [0] : vector<8x8xf32> to vector<8xf32>
    %37 = vector.shape_cast %36 : vector<8xf32> to vector<1x8xf32>
    %38 = tpu.reciprocal %37 : vector<1x8xf32> -> vector<1x8xf32>
    %39 = vector.broadcast %38 : vector<1x8xf32> to vector<8x8xf32>
    %40 = arith.mulf %35, %39 : vector<8x8xf32>
    %cst_23 = arith.constant dense<0.000000e+00> : vector<8x8xf32>
    %41 = tpu.matmul %40, %29, %cst_23 {dimension_numbers = #tpu.dot_dimension_numbers<[1], [0], [0], [1], [0, 0, 1, 1], [], []>} : vector<8x8xf32>, vector<8x8xf32>, vector<8x8xf32> -> vector<8x8xf32>
    %42 = vector.extract_strided_slice %7 {offsets = [0, 16], sizes = [8, 8], strides = [1, 1]} : vector<8x32xf32> to vector<8x8xf32>
    %43 = vector.extract_strided_slice %9 {offsets = [0, 16], sizes = [8, 8], strides = [1, 1]} : vector<8x32xf32> to vector<8x8xf32>
    %44 = vector.extract_strided_slice %11 {offsets = [0, 16], sizes = [8, 8], strides = [1, 1]} : vector<8x32xf32> to vector<8x8xf32>
    %cst_24 = arith.constant dense<0.000000e+00> : vector<8x8xf32>
    %45 = tpu.matmul %42, %43, %cst_24 {dimension_numbers = #tpu.dot_dimension_numbers<[1], [1], [0], [0], [0, 0, 1, 0], [], []>} : vector<8x8xf32>, vector<8x8xf32>, vector<8x8xf32> -> vector<8x8xf32>
    %cst_25 = arith.constant dense<0xFF800000> : vector<8xf32>
    %46 = vector.multi_reduction <maximumf>, %45, %cst_25 [0] : vector<8x8xf32> to vector<8xf32>
    %47 = vector.shape_cast %46 : vector<8xf32> to vector<1x8xf32>
    %48 = vector.broadcast %47 : vector<1x8xf32> to vector<8x8xf32>
    %49 = arith.subf %45, %48 : vector<8x8xf32>
    %50 = math.exp %49 : vector<8x8xf32>
    %cst_26 = arith.constant dense<0.000000e+00> : vector<8xf32>
    %51 = vector.multi_reduction <add>, %50, %cst_26 [0] : vector<8x8xf32> to vector<8xf32>
    %52 = vector.shape_cast %51 : vector<8xf32> to vector<1x8xf32>
    %53 = tpu.reciprocal %52 : vector<1x8xf32> -> vector<1x8xf32>
    %54 = vector.broadcast %53 : vector<1x8xf32> to vector<8x8xf32>
    %55 = arith.mulf %50, %54 : vector<8x8xf32>
    %cst_27 = arith.constant dense<0.000000e+00> : vector<8x8xf32>
    %56 = tpu.matmul %55, %44, %cst_27 {dimension_numbers = #tpu.dot_dimension_numbers<[1], [0], [0], [1], [0, 0, 1, 1], [], []>} : vector<8x8xf32>, vector<8x8xf32>, vector<8x8xf32> -> vector<8x8xf32>
    %57 = vector.extract_strided_slice %7 {offsets = [0, 24], sizes = [8, 8], strides = [1, 1]} : vector<8x32xf32> to vector<8x8xf32>
    %58 = vector.extract_strided_slice %9 {offsets = [0, 24], sizes = [8, 8], strides = [1, 1]} : vector<8x32xf32> to vector<8x8xf32>
    %59 = vector.extract_strided_slice %11 {offsets = [0, 24], sizes = [8, 8], strides = [1, 1]} : vector<8x32xf32> to vector<8x8xf32>
    %cst_28 = arith.constant dense<0.000000e+00> : vector<8x8xf32>
    %60 = tpu.matmul %57, %58, %cst_28 {dimension_numbers = #tpu.dot_dimension_numbers<[1], [1], [0], [0], [0, 0, 1, 0], [], []>} : vector<8x8xf32>, vector<8x8xf32>, vector<8x8xf32> -> vector<8x8xf32>
    %cst_29 = arith.constant dense<0xFF800000> : vector<8xf32>
    %61 = vector.multi_reduction <maximumf>, %60, %cst_29 [0] : vector<8x8xf32> to vector<8xf32>
    %62 = vector.shape_cast %61 : vector<8xf32> to vector<1x8xf32>
    %63 = vector.broadcast %62 : vector<1x8xf32> to vector<8x8xf32>
    %64 = arith.subf %60, %63 : vector<8x8xf32>
    %65 = math.exp %64 : vector<8x8xf32>
    %cst_30 = arith.constant dense<0.000000e+00> : vector<8xf32>
    %66 = vector.multi_reduction <add>, %65, %cst_30 [0] : vector<8x8xf32> to vector<8xf32>
    %67 = vector.shape_cast %66 : vector<8xf32> to vector<1x8xf32>
    %68 = tpu.reciprocal %67 : vector<1x8xf32> -> vector<1x8xf32>
    %69 = vector.broadcast %68 : vector<1x8xf32> to vector<8x8xf32>
    %70 = arith.mulf %65, %69 : vector<8x8xf32>
    %cst_31 = arith.constant dense<0.000000e+00> : vector<8x8xf32>
    %71 = tpu.matmul %70, %59, %cst_31 {dimension_numbers = #tpu.dot_dimension_numbers<[1], [0], [0], [1], [0, 0, 1, 1], [], []>} : vector<8x8xf32>, vector<8x8xf32>, vector<8x8xf32> -> vector<8x8xf32>
    %72 = tpu.concatenate %26, %41, %56, %71 in 1 : vector<8x8xf32>, vector<8x8xf32>, vector<8x8xf32>, vector<8x8xf32> -> vector<8x32xf32>
    %c0_32 = arith.constant 0 : index
    %c0_33 = arith.constant 0 : index
    %73 = vector.load %arg7[%c0_32, %c0_33] : memref<32x32xf32, #tpu.memory_space<vmem>>, vector<32x32xf32>
    %cst_34 = arith.constant dense<0.000000e+00> : vector<8x32xf32>
    %74 = tpu.matmul %72, %73, %cst_34 {dimension_numbers = #tpu.dot_dimension_numbers<[1], [0], [0], [1], [0, 0, 1, 1], [], []>} : vector<8x32xf32>, vector<32x32xf32>, vector<8x32xf32> -> vector<8x32xf32>
    %c0_35 = arith.constant 0 : index
    %c0_36 = arith.constant 0 : index
    %75 = vector.load %arg8[%c0_35, %c0_36] : memref<1x32xf32, #tpu.memory_space<vmem>>, vector<1x32xf32>
    %76 = vector.broadcast %75 : vector<1x32xf32> to vector<8x32xf32>
    %77 = arith.addf %74, %76 : vector<8x32xf32>
    %c0_37 = arith.constant 0 : index
    %c0_38 = arith.constant 0 : index
    %c0_39 = arith.constant 0 : index
    %78 = vector.load %arg9[%c0_37, %c0_38, %c0_39] : memref<1x8x32xf32, #tpu.memory_space<vmem>>, vector<1x8x32xf32>
    %79 = vector.shape_cast %78 : vector<1x8x32xf32> to vector<8x32xf32>
    %80 = vector.shape_cast %77 : vector<8x32xf32> to vector<1x8x32xf32>
    tpu.vector_store %arg9[%c0_37, %c0_38, %c0_39], %80 {strides = array<i32>} : memref<1x8x32xf32, #tpu.memory_space<vmem>>, vector<1x8x32xf32>,
    return
  }
  func.func @transform_0(%arg0: i32) -> (i32, i32, i32) {
    %c0_i32 = arith.constant 0 : i32
    %c0_i32_0 = arith.constant 0 : i32
    %c0_i32_1 = arith.constant 0 : i32
    return %arg0, %c0_i32, %c0_i32_0 : i32, i32, i32
  }
  func.func @transform_1(%arg0: i32) -> (i32, i32, i32) {
    %c0_i32 = arith.constant 0 : i32
    %c0_i32_0 = arith.constant 0 : i32
    %c0_i32_1 = arith.constant 0 : i32
    return %arg0, %c0_i32, %c0_i32_0 : i32, i32, i32
  }
  func.func @transform_2(%arg0: i32) -> (i32, i32, i32) {
    %c0_i32 = arith.constant 0 : i32
    %c0_i32_0 = arith.constant 0 : i32
    %c0_i32_1 = arith.constant 0 : i32
    return %arg0, %c0_i32, %c0_i32_0 : i32, i32, i32
  }
  func.func @transform_3(%arg0: i32) -> (i32, i32) {
    %c0_i32 = arith.constant 0 : i32
    %c0_i32_0 = arith.constant 0 : i32
    %c0_i32_1 = arith.constant 0 : i32
    return %c0_i32, %c0_i32_0 : i32, i32
  }
  func.func @transform_4(%arg0: i32) -> (i32, i32) {
    %c0_i32 = arith.constant 0 : i32
    %c0_i32_0 = arith.constant 0 : i32
    %c0_i32_1 = arith.constant 0 : i32
    return %c0_i32, %c0_i32_0 : i32, i32
  }
  func.func @transform_5(%arg0: i32) -> (i32, i32) {
    %c0_i32 = arith.constant 0 : i32
    %c0_i32_0 = arith.constant 0 : i32
    %c0_i32_1 = arith.constant 0 : i32
    return %c0_i32, %c0_i32_0 : i32, i32
  }
  func.func @transform_6(%arg0: i32) -> (i32, i32) {
    %c0_i32 = arith.constant 0 : i32
    %c0_i32_0 = arith.constant 0 : i32
    %c0_i32_1 = arith.constant 0 : i32
    return %c0_i32, %c0_i32_0 : i32, i32
  }
  func.func @transform_7(%arg0: i32) -> (i32, i32) {
    %c0_i32 = arith.constant 0 : i32
    %c0_i32_0 = arith.constant 0 : i32
    %c0_i32_1 = arith.constant 0 : i32
    return %c0_i32, %c0_i32_0 : i32, i32
  }
  func.func @transform_8(%arg0: i32) -> (i32, i32, i32) {
    %c0_i32 = arith.constant 0 : i32
    %c0_i32_0 = arith.constant 0 : i32
    %c0_i32_1 = arith.constant 0 : i32
    return %arg0, %c0_i32, %c0_i32_0 : i32, i32, i32
  }
}

</mosaic_0001>

<llo_original>
// kernel: tpu_custom_call.1
$region0: #{tpu_custom_call.1}
  #allocation0 [shape = 'u32[]', space=smem, size = 0x4, offset = 0x4, fixed_abs, tag = 'smem constant byte address 0x4 - core index']
  #allocation1 [shape = 'u32[72,128]{1,0:T(1,128)}', space=vmem, size = 0x9000, scoped, tag = 'internal scratch']
  %s0 = inlined_call_operand.hbm [shape: f32[2,8,32], index: 0, kind: input, shape index: {}]
  %s1 = inlined_call_operand.hbm [shape: f32[2,8,32], index: 1, kind: input, shape index: {}]
  %s2 = inlined_call_operand.hbm [shape: f32[2,8,32], index: 2, kind: input, shape index: {}]
  %s3 = inlined_call_operand.hbm [shape: f32[32,32], index: 3, kind: input, shape index: {}]
  %s4 = inlined_call_operand.hbm [shape: f32[32,32], index: 4, kind: input, shape index: {}]
  %s5 = inlined_call_operand.hbm [shape: f32[32,32], index: 5, kind: input, shape index: {}]
  %s6 = inlined_call_operand.hbm [shape: f32[32,32], index: 6, kind: input, shape index: {}]
  %s7 = inlined_call_operand.vmem [shape: f32[1,32], index: 7, kind: input, shape index: {}]
  %s8 = inlined_call_operand.hbm [shape: f32[2,8,32], index: 8, kind: output, shape index: {}]
  %s9 = sld [smem:[#allocation0]]
  $region93: #{tpu_custom_call.1} parent=0
    _
  %s11 = ssub.s32 1, %s9
  %s12 = scalar_select 0, %s11, %s9
  $region1: #{tpu_custom_call.1} parent=0
    #allocation2 [shape = 'u8[8192]{0}', space=vmem, size = 0x2000, scoped, tag = 'input window, operand 0']
    #allocation3 [shape = 's32[2]{0}', space=sflag, size = 0x8, scoped, tag = 'scoped memory for tpu_custom_call.1']
    #allocation4 [shape = 's32[2]{0}', space=sflag, size = 0x8, scoped, tag = 'scoped memory for tpu_custom_call.1']
    #allocation5 [shape = 'u8[8192]{0}', space=vmem, size = 0x2000, scoped, tag = 'input window, operand 1']
    #allocation6 [shape = 's32[2]{0}', space=sflag, size = 0x8, scoped, tag = 'scoped memory for tpu_custom_call.1']
    #allocation7 [shape = 'u8[8192]{0}', space=vmem, size = 0x2000, scoped, tag = 'input window, operand 2']
    #allocation8 [shape = 'u8[16384]{0}', space=vmem, size = 0x4000, scoped, tag = 'input window, operand 3, single buffered']
    #allocation9 [shape = 's32[1]{0}', space=sflag, size = 0x4, scoped, tag = 'scoped memory for tpu_custom_call.1']
    #allocation10 [shape = 'u8[16384]{0}', space=vmem, size = 0x4000, scoped, tag = 'input window, operand 4, single buffered']
    #allocation11 [shape = 'u8[16384]{0}', space=vmem, size = 0x4000, scoped, tag = 'input window, operand 5, single buffered']
    #allocation12 [shape = 's32[1]{0}', space=sflag, size = 0x4, scoped, tag = 'scoped memory for tpu_custom_call.1']
    #allocation13 [shape = 'u8[16384]{0}', space=vmem, size = 0x4000, scoped, tag = 'input window, operand 6, single buffered']
    #allocation14 [shape = 'u8[8192]{0}', space=vmem, size = 0x2000, scoped, tag = 'output window, operand 0']
    %13 = vsyncpa [#allocation3], 0
    %s14 = scalar_lea.sflag [#allocation3], 1
    %15 = vsyncpa %s14, 0
    %16 = vsyncpa [#allocation6], 0
    %s17 = scalar_lea.sflag [#allocation6], 1
    %18 = vsyncpa %s17, 0
    %19 = vsyncpa [#allocation9], 0
    %20 = vsyncpa [#allocation12], 0
    %21 = vsyncpa [#allocation4], 0
    %s22 = scalar_lea.sflag [#allocation4], 1
    %23 = vsyncpa %s22, 0
    loop: start=0, step=1, limit=4
    $region2: #{tpu_custom_call.1} parent=1 // loop_pre_header
      _
    $region3: #{tpu_custom_call.1} parent=1 // loop_header
      %s25 = sphi 0, %s29
      %p26 = scmp.ge.s32.totalorder %s25, 4
      %s35 = sphi 0, %s37
      %s38 = sphi 0, %s35
      %s39 = sphi 0, %s38
      %s55 = sphi 0, %s39
      %s61 = sphi 0, %s63
      %s64 = sphi 0, %s61
      %s65 = sphi 0, %s64
      %s81 = sphi 0, %s65
      %s87 = sphi 0, %s89
      %s90 = sphi 0, %s87
      %s91 = sphi 0, %s90
      %s107 = sphi 0, %s91
      %s111 = sphi 0, %s111
      %s113 = sphi 0, %s111
      %s114 = sphi 0, %s113
      %s128 = sphi 0, %s114
      %s132 = sphi 0, %s132
      %s134 = sphi 0, %s132
      %s135 = sphi 0, %s134
      %s149 = sphi 0, %s135
      %s153 = sphi 0, %s153
      %s155 = sphi 0, %s153
      %s156 = sphi 0, %s155
      %s170 = sphi 0, %s156
      %s174 = sphi 0, %s174
      %s176 = sphi 0, %s174
      %s177 = sphi 0, %s176
      %s191 = sphi 0, %s177
      %s195 = sphi 0, %s195
      %s197 = sphi 0, %s195
      %s198 = sphi 0, %s197
      %s212 = sphi 0, %s198
      %s218 = sphi 0, %s220
      %s221 = sphi 0, %s218
      %s222 = sphi 0, %s221
      %s238 = sphi 0, %s222
    $region4: #{tpu_custom_call.1} parent=1 // loop_header_branch
      %28 = sbr.rel (%p26) target = $region8
    $region5: #{tpu_custom_call.1} parent=1 // loop_body
      %s30 = ssub.s32 %s25, 1
      %s31 = ssub.s32 %s25, 2
      %s32 = sadd.s32 %s25, 1
      %s33 = ssub.s32 %s25, %s32
      %p34 = scmp.eq.s32.totalorder %s33, 0
      %s36 = sadd.s32 %s35, 1
      %s37 = scalar_select %p34, %s35, %s36
      %p40 = pneg %p34
      %p41 = scmp.eq.s32.totalorder %s25, 1
      %p42 = por %p40, %p41
      %p43 = scmp.ne.s32.totalorder %s35, %s38
      %p44 = scmp.eq.s32.totalorder %s25, 0
      %p45 = por %p43, %p44
      %p46 = scmp.ne.s32.totalorder %s35, %s38
      %p47 = scmp.eq.s32.totalorder %s30, 1
      %p48 = por %p46, %p47
      %p49 = scmp.ne.s32.totalorder %s38, %s39
      %p50 = scmp.eq.s32.totalorder %s30, 0
      %p51 = por %p49, %p50
      %p52 = scmp.ne.s32.totalorder %s38, %s39
      %p53 = scmp.eq.s32.totalorder %s31, 1
      %p54 = por %p52, %p53
      %p56 = scmp.ne.s32.totalorder %s39, %s55
      %p57 = scmp.eq.s32.totalorder %s31, 0
      %p58 = por %p56, %p57
      %s59 = ssub.s32 %s25, %s32
      %p60 = scmp.eq.s32.totalorder %s59, 0
      %s62 = sadd.s32 %s61, 1
      %s63 = scalar_select %p60, %s61, %s62
      %p66 = pneg %p60
      %p67 = scmp.eq.s32.totalorder %s25, 1
      %p68 = por %p66, %p67
      %p69 = scmp.ne.s32.totalorder %s61, %s64
      %p70 = scmp.eq.s32.totalorder %s25, 0
      %p71 = por %p69, %p70
      %p72 = scmp.ne.s32.totalorder %s61, %s64
      %p73 = scmp.eq.s32.totalorder %s30, 1
      %p74 = por %p72, %p73
      %p75 = scmp.ne.s32.totalorder %s64, %s65
      %p76 = scmp.eq.s32.totalorder %s30, 0
      %p77 = por %p75, %p76
      %p78 = scmp.ne.s32.totalorder %s64, %s65
      %p79 = scmp.eq.s32.totalorder %s31, 1
      %p80 = por %p78, %p79
      %p82 = scmp.ne.s32.totalorder %s65, %s81
      %p83 = scmp.eq.s32.totalorder %s31, 0
      %p84 = por %p82, %p83
      %s85 = ssub.s32 %s25, %s32
      %p86 = scmp.eq.s32.totalorder %s85, 0
      %s88 = sadd.s32 %s87, 1
      %s89 = scalar_select %p86, %s87, %s88
      %p92 = pneg %p86
      %p93 = scmp.eq.s32.totalorder %s25, 1
      %p94 = por %p92, %p93
      %p95 = scmp.ne.s32.totalorder %s87, %s90
      %p96 = scmp.eq.s32.totalorder %s25, 0
      %p97 = por %p95, %p96
      %p98 = scmp.ne.s32.totalorder %s87, %s90
      %p99 = scmp.eq.s32.totalorder %s30, 1
      %p100 = por %p98, %p99
      %p101 = scmp.ne.s32.totalorder %s90, %s91
      %p102 = scmp.eq.s32.totalorder %s30, 0
      %p103 = por %p101, %p102
      %p104 = scmp.ne.s32.totalorder %s90, %s91
      %p105 = scmp.eq.s32.totalorder %s31, 1
      %p106 = por %p104, %p105
      %p108 = scmp.ne.s32.totalorder %s91, %s107
      %p109 = scmp.eq.s32.totalorder %s31, 0
      %p110 = por %p108, %p109
      %s112 = sadd.s32 %s111, 1
      %p115 = scmp.eq.s32.totalorder %s25, 1
      %p116 = scmp.ne.s32.totalorder %s111, %s113
      %p117 = scmp.eq.s32.totalorder %s25, 0
      %p118 = por %p116, %p117
      %p119 = scmp.ne.s32.totalorder %s111, %s113
      %p120 = scmp.eq.s32.totalorder %s30, 1
      %p121 = por %p119, %p120
      %p122 = scmp.ne.s32.totalorder %s113, %s114
      %p123 = scmp.eq.s32.totalorder %s30, 0
      %p124 = por %p122, %p123
      %p125 = scmp.ne.s32.totalorder %s113, %s114
      %p126 = scmp.eq.s32.totalorder %s31, 1
      %p127 = por %p125, %p126
      %p129 = scmp.ne.s32.totalorder %s114, %s128
      %p130 = scmp.eq.s32.totalorder %s31, 0
      %p131 = por %p129, %p130
      %s133 = sadd.s32 %s132, 1
      %p136 = scmp.eq.s32.totalorder %s25, 1
      %p137 = scmp.ne.s32.totalorder %s132, %s134
      %p138 = scmp.eq.s32.totalorder %s25, 0
      %p139 = por %p137, %p138
      %p140 = scmp.ne.s32.totalorder %s132, %s134
      %p141 = scmp.eq.s32.totalorder %s30, 1
      %p142 = por %p140, %p141
      %p143 = scmp.ne.s32.totalorder %s134, %s135
      %p144 = scmp.eq.s32.totalorder %s30, 0
      %p145 = por %p143, %p144
      %p146 = scmp.ne.s32.totalorder %s134, %s135
      %p147 = scmp.eq.s32.totalorder %s31, 1
      %p148 = por %p146, %p147
      %p150 = scmp.ne.s32.totalorder %s135, %s149
      %p151 = scmp.eq.s32.totalorder %s31, 0
      %p152 = por %p150, %p151
      %s154 = sadd.s32 %s153, 1
      %p157 = scmp.eq.s32.totalorder %s25, 1
      %p158 = scmp.ne.s32.totalorder %s153, %s155
      %p159 = scmp.eq.s32.totalorder %s25, 0
      %p160 = por %p158, %p159
      %p161 = scmp.ne.s32.totalorder %s153, %s155
      %p162 = scmp.eq.s32.totalorder %s30, 1
      %p163 = por %p161, %p162
      %p164 = scmp.ne.s32.totalorder %s155, %s156
      %p165 = scmp.eq.s32.totalorder %s30, 0
      %p166 = por %p164, %p165
      %p167 = scmp.ne.s32.totalorder %s155, %s156
      %p168 = scmp.eq.s32.totalorder %s31, 1
      %p169 = por %p167, %p168
      %p171 = scmp.ne.s32.totalorder %s156, %s170
      %p172 = scmp.eq.s32.totalorder %s31, 0
      %p173 = por %p171, %p172
      %s175 = sadd.s32 %s174, 1
      %p178 = scmp.eq.s32.totalorder %s25, 1
      %p179 = scmp.ne.s32.totalorder %s174, %s176
      %p180 = scmp.eq.s32.totalorder %s25, 0
      %p181 = por %p179, %p180
      %p182 = scmp.ne.s32.totalorder %s174, %s176
      %p183 = scmp.eq.s32.totalorder %s30, 1
      %p184 = por %p182, %p183
      %p185 = scmp.ne.s32.totalorder %s176, %s177
      %p186 = scmp.eq.s32.totalorder %s30, 0
      %p187 = por %p185, %p186
      %p188 = scmp.ne.s32.totalorder %s176, %s177
      %p189 = scmp.eq.s32.totalorder %s31, 1
      %p190 = por %p188, %p189
      %p192 = scmp.ne.s32.totalorder %s177, %s191
      %p193 = scmp.eq.s32.totalorder %s31, 0
      %p194 = por %p192, %p193
      %s196 = sadd.s32 %s195, 1
      %p199 = scmp.eq.s32.totalorder %s25, 1
      %p200 = scmp.ne.s32.totalorder %s195, %s197
      %p201 = scmp.eq.s32.totalorder %s25, 0
      %p202 = por %p200, %p201
      %p203 = scmp.ne.s32.totalorder %s195, %s197
      %p204 = scmp.eq.s32.totalorder %s30, 1
      %p205 = por %p203, %p204
      %p206 = scmp.ne.s32.totalorder %s197, %s198
      %p207 = scmp.eq.s32.totalorder %s30, 0
      %p208 = por %p206, %p207
      %p209 = scmp.ne.s32.totalorder %s197, %s198
      %p210 = scmp.eq.s32.totalorder %s31, 1
      %p211 = por %p209, %p210
      %p213 = scmp.ne.s32.totalorder %s198, %s212
      %p214 = scmp.eq.s32.totalorder %s31, 0
      %p215 = por %p213, %p214
      %s216 = ssub.s32 %s25, %s32
      %p217 = scmp.eq.s32.totalorder %s216, 0
      %s219 = sadd.s32 %s218, 1
      %s220 = scalar_select %p217, %s218, %s219
      %p223 = pneg %p217
      %p224 = scmp.eq.s32.totalorder %s25, 1
      %p225 = por %p223, %p224
      %p226 = scmp.ne.s32.totalorder %s218, %s221
      %p227 = scmp.eq.s32.totalorder %s25, 0
      %p228 = por %p226, %p227
      %p229 = scmp.ne.s32.totalorder %s218, %s221
      %p230 = scmp.eq.s32.totalorder %s30, 1
      %p231 = por %p229, %p230
      %p232 = scmp.ne.s32.totalorder %s221, %s222
      %p233 = scmp.eq.s32.totalorder %s30, 0
      %p234 = por %p232, %p233
      %p235 = scmp.ne.s32.totalorder %s221, %s222
      %p236 = scmp.eq.s32.totalorder %s31, 1
      %p237 = por %p235, %p236
      %p239 = scmp.ne.s32.totalorder %s222, %s238
      %p240 = scmp.eq.s32.totalorder %s31, 0
      %p241 = por %p239, %p240
      %p242 = scmp.le.s32.totalorder 1, %s25
      %p243 = scmp.lt.s32.totalorder %s25, 3
      %p244 = pnand %p242, %p243
      %p245 = pneg %p244
      // Predicated region
      $region9: #{tpu_custom_call.1} parent=5 // pred_check
        _
      $region10: #{tpu_custom_call.1} parent=5 // pred_check_branch
        %247 = sbr.rel (%p244) target = $region12
      $region11: #{tpu_custom_call.1} parent=5 // pred_region
        %s248 = ssub.s32 %s25, 1
        // Predicated region
        $region13: #{tpu_custom_call.1} parent=11 // pred_check
          %p249 = pneg %p124
        $region14: #{tpu_custom_call.1} parent=11 // pred_check_branch
          %251 = sbr.rel (%p249) target = $region16
        $region15: #{tpu_custom_call.1} parent=11 // pred_region
          %253 = vsyncadd [#allocation9], 0
          %s254 = sshll.u32 %s3, 4
          %s255 = int_to_ptr.hbm [resolvable:$true] %s254
          %s256 = sshll.u32 [#allocation8], 4
          %s257 = int_to_ptr.vmem [resolvable:$true] %s256
          %262 = dma.hbm_to_vmem [thread:$0]  %s255, 512, %s257, [#allocation9], 128, 128, 8
        $region16: #{tpu_custom_call.1} parent=11 // pred_fallthru
          _
        // Predicated region
        $region17: #{tpu_custom_call.1} parent=11 // pred_check
          %p263 = pneg %p145
        $region18: #{tpu_custom_call.1} parent=11 // pred_check_branch
          %265 = sbr.rel (%p263) target = $region20
        $region19: #{tpu_custom_call.1} parent=11 // pred_region
          %267 = vsyncadd [#allocation9], 0
          %s268 = sshll.u32 %s4, 4
          %s269 = int_to_ptr.hbm [resolvable:$true] %s268
          %s270 = sshll.u32 [#allocation10], 4
          %s271 = int_to_ptr.vmem [resolvable:$true] %s270
          %276 = dma.hbm_to_vmem [thread:$0]  %s269, 512, %s271, [#allocation9], 128, 128, 8
        $region20: #{tpu_custom_call.1} parent=11 // pred_fallthru
          _
        // Predicated region
        $region21: #{tpu_custom_call.1} parent=11 // pred_check
          %p277 = pneg %p166
        $region22: #{tpu_custom_call.1} parent=11 // pred_check_branch
          %279 = sbr.rel (%p277) target = $region24
        $region23: #{tpu_custom_call.1} parent=11 // pred_region
          %281 = vsyncadd [#allocation12], 0
          %s282 = sshll.u32 %s5, 4
          %s283 = int_to_ptr.hbm [resolvable:$true] %s282
          %s284 = sshll.u32 [#allocation11], 4
          %s285 = int_to_ptr.vmem [resolvable:$true] %s284
          %290 = dma.hbm_to_vmem [thread:$0]  %s283, 512, %s285, [#allocation12], 128, 128, 8
        $region24: #{tpu_custom_call.1} parent=11 // pred_fallthru
          _
        // Predicated region
        $region25: #{tpu_custom_call.1} parent=11 // pred_check
          %p291 = pneg %p187
        $region26: #{tpu_custom_call.1} parent=11 // pred_check_branch
          %293 = sbr.rel (%p291) target = $region28
        $region27: #{tpu_custom_call.1} parent=11 // pred_region
          %295 = vsyncadd [#allocation12], 0
          %s296 = sshll.u32 %s6, 4
          %s297 = int_to_ptr.hbm [resolvable:$true] %s296
          %s298 = sshll.u32 [#allocation13], 4
          %s299 = int_to_ptr.vmem [resolvable:$true] %s298
          %304 = dma.hbm_to_vmem [thread:$0]  %s297, 512, %s299, [#allocation12], 128, 128, 8
        $region28: #{tpu_custom_call.1} parent=11 // pred_fallthru
          _
        // Predicated region
        $region29: #{tpu_custom_call.1} parent=11 // pred_check
          %p305 = pneg %p208
        $region30: #{tpu_custom_call.1} parent=11 // pred_check_branch
          %307 = sbr.rel (%p305) target = $region32
        $region31: #{tpu_custom_call.1} parent=11 // pred_region
          _
        $region32: #{tpu_custom_call.1} parent=11 // pred_fallthru
          _
      $region12: #{tpu_custom_call.1} parent=5 // pred_fallthru
        _
      %p308 = scmp.lt.s32.totalorder %s25, 2
      // Predicated region
      $region33: #{tpu_custom_call.1} parent=5 // pred_check
        %p309 = pneg %p308
      $region34: #{tpu_custom_call.1} parent=5 // pred_check_branch
        %311 = sbr.rel (%p309) target = $region36
      $region35: #{tpu_custom_call.1} parent=5 // pred_region
        // Predicated region
        $region37: #{tpu_custom_call.1} parent=35 // pred_check
          %p312 = pneg %p45
        $region38: #{tpu_custom_call.1} parent=35 // pred_check_branch
          %314 = sbr.rel (%p312) target = $region40
        $region39: #{tpu_custom_call.1} parent=35 // pred_region
          %s315 = sand.u32 %s35, 1
          %s316 = scalar_lea.sflag [#allocation3], %s315
          %s317 = sand.u32 %s35, 1
          %s318 = smul.addr %s317, 8
          %s319 = scalar_lea.vmem [#allocation2], %s318
          %321 = vsyncadd %s316, 0
          %s322 = smul.addr %s25, 8
          %s323 = scalar_lea.hbm %s0, %s322
          %s325 = sshll.u32 %s323, 4
          %s326 = int_to_ptr.hbm [resolvable:$true] %s325
          %s327 = sshll.u32 %s319, 4
          %s328 = int_to_ptr.vmem [resolvable:$true] %s327
          %330 = dma.hbm_to_vmem [thread:$0]  %s326, 128, %s328, %s316
        $region40: #{tpu_custom_call.1} parent=35 // pred_fallthru
          _
        // Predicated region
        $region41: #{tpu_custom_call.1} parent=35 // pred_check
          %p331 = pneg %p71
        $region42: #{tpu_custom_call.1} parent=35 // pred_check_branch
          %333 = sbr.rel (%p331) target = $region44
        $region43: #{tpu_custom_call.1} parent=35 // pred_region
          %s334 = sand.u32 %s25, 1
          %s335 = scalar_lea.sflag [#allocation6], %s334
          %s336 = sand.u32 %s61, 1
          %s337 = smul.addr %s336, 8
          %s338 = scalar_lea.vmem [#allocation5], %s337
          %340 = vsyncadd %s335, 0
          %s341 = smul.addr %s25, 8
          %s342 = scalar_lea.hbm %s1, %s341
          %s344 = sshll.u32 %s342, 4
          %s345 = int_to_ptr.hbm [resolvable:$true] %s344
          %s346 = sshll.u32 %s338, 4
          %s347 = int_to_ptr.vmem [resolvable:$true] %s346
          %349 = dma.hbm_to_vmem [thread:$0]  %s345, 128, %s347, %s335
        $region44: #{tpu_custom_call.1} parent=35 // pred_fallthru
          _
        // Predicated region
        $region45: #{tpu_custom_call.1} parent=35 // pred_check
          %p350 = pneg %p97
        $region46: #{tpu_custom_call.1} parent=35 // pred_check_branch
          %352 = sbr.rel (%p350) target = $region48
        $region47: #{tpu_custom_call.1} parent=35 // pred_region
          %s353 = sand.u32 %s25, 1
          %s354 = scalar_lea.sflag [#allocation6], %s353
          %s355 = sand.u32 %s87, 1
          %s356 = smul.addr %s355, 8
          %s357 = scalar_lea.vmem [#allocation7], %s356
          %359 = vsyncadd %s354, 0
          %s360 = smul.addr %s25, 8
          %s361 = scalar_lea.hbm %s2, %s360
          %s363 = sshll.u32 %s361, 4
          %s364 = int_to_ptr.hbm [resolvable:$true] %s363
          %s365 = sshll.u32 %s357, 4
          %s366 = int_to_ptr.vmem [resolvable:$true] %s365
          %368 = dma.hbm_to_vmem [thread:$0]  %s364, 128, %s366, %s354
        $region48: #{tpu_custom_call.1} parent=35 // pred_fallthru
          _
      $region36: #{tpu_custom_call.1} parent=5 // pred_fallthru
        _
      %p369 = scmp.le.s32.totalorder 1, %s25
      %p370 = scmp.lt.s32.totalorder %s25, 3
      %p371 = pnand %p369, %p370
      %p372 = pneg %p371
      // Predicated region
      $region49: #{tpu_custom_call.1} parent=5 // pred_check
        _
      $region50: #{tpu_custom_call.1} parent=5 // pred_check_branch
        %374 = sbr.rel (%p371) target = $region52
      $region51: #{tpu_custom_call.1} parent=5 // pred_region
        %s375 = ssub.s32 %s25, 1
        %s376 = sand.u32 %s38, 1
        %s377 = scalar_lea.sflag [#allocation3], %s376
        %s378 = sand.u32 %s38, 1
        %s379 = smul.addr %s378, 8
        %s380 = scalar_lea.vmem [#allocation2], %s379
        // Predicated region
        $region53: #{tpu_custom_call.1} parent=51 // pred_check
          %p381 = pneg %p51
        $region54: #{tpu_custom_call.1} parent=51 // pred_check_branch
          %383 = sbr.rel (%p381) target = $region56
        $region55: #{tpu_custom_call.1} parent=51 // pred_region
          %385 = dma.done %s377, 128
        $region56: #{tpu_custom_call.1} parent=51 // pred_fallthru
          _
        %s386 = sand.u32 %s30, 1
        %s387 = scalar_lea.sflag [#allocation6], %s386
        %s388 = sand.u32 %s64, 1
        %s389 = smul.addr %s388, 8
        %s390 = scalar_lea.vmem [#allocation5], %s389
        // Predicated region
        $region57: #{tpu_custom_call.1} parent=51 // pred_check
          %p391 = pneg %p77
        $region58: #{tpu_custom_call.1} parent=51 // pred_check_branch
          %393 = sbr.rel (%p391) target = $region60
        $region59: #{tpu_custom_call.1} parent=51 // pred_region
          %395 = dma.done %s387, 128
        $region60: #{tpu_custom_call.1} parent=51 // pred_fallthru
          _
        %s396 = sand.u32 %s30, 1
        %s397 = scalar_lea.sflag [#allocation6], %s396
        %s398 = sand.u32 %s90, 1
        %s399 = smul.addr %s398, 8
        %s400 = scalar_lea.vmem [#allocation7], %s399
        // Predicated region
        $region61: #{tpu_custom_call.1} parent=51 // pred_check
          %p401 = pneg %p103
        $region62: #{tpu_custom_call.1} parent=51 // pred_check_branch
          %403 = sbr.rel (%p401) target = $region64
        $region63: #{tpu_custom_call.1} parent=51 // pred_region
          %405 = dma.done %s397, 128
        $region64: #{tpu_custom_call.1} parent=51 // pred_fallthru
          _
        // Predicated region
        $region65: #{tpu_custom_call.1} parent=51 // pred_check
          %p406 = pneg %p124
        $region66: #{tpu_custom_call.1} parent=51 // pred_check_branch
          %408 = sbr.rel (%p406) target = $region68
        $region67: #{tpu_custom_call.1} parent=51 // pred_region
          %410 = dma.done [#allocation9], 512
        $region68: #{tpu_custom_call.1} parent=51 // pred_fallthru
          _
        // Predicated region
        $region69: #{tpu_custom_call.1} parent=51 // pred_check
          %p411 = pneg %p145
        $region70: #{tpu_custom_call.1} parent=51 // pred_check_branch
          %413 = sbr.rel (%p411) target = $region72
        $region71: #{tpu_custom_call.1} parent=51 // pred_region
          %415 = dma.done [#allocation9], 512
        $region72: #{tpu_custom_call.1} parent=51 // pred_fallthru
          _
        // Predicated region
        $region73: #{tpu_custom_call.1} parent=51 // pred_check
          %p416 = pneg %p166
        $region74: #{tpu_custom_call.1} parent=51 // pred_check_branch
          %418 = sbr.rel (%p416) target = $region76
        $region75: #{tpu_custom_call.1} parent=51 // pred_region
          %420 = dma.done [#allocation12], 512
        $region76: #{tpu_custom_call.1} parent=51 // pred_fallthru
          _
        // Predicated region
        $region77: #{tpu_custom_call.1} parent=51 // pred_check
          %p421 = pneg %p187
        $region78: #{tpu_custom_call.1} parent=51 // pred_check_branch
          %423 = sbr.rel (%p421) target = $region80
        $region79: #{tpu_custom_call.1} parent=51 // pred_region
          %425 = dma.done [#allocation12], 512
        $region80: #{tpu_custom_call.1} parent=51 // pred_fallthru
          _
        %s426 = sand.u32 %s38, 1
        %s427 = scalar_lea.sflag [#allocation3], %s426
        %s428 = sand.u32 %s38, 1
        %s429 = smul.addr %s428, 8
        %s430 = scalar_lea.vmem [#allocation2], %s429
        %p431 = pneg %p51
        %p432 = pneg %p48
        %s433 = sand.u32 %s30, 1
        %s434 = scalar_lea.sflag [#allocation6], %s433
        %s435 = sand.u32 %s64, 1
        %s436 = smul.addr %s435, 8
        %s437 = scalar_lea.vmem [#allocation5], %s436
        %p438 = pneg %p77
        %p439 = pneg %p74
        %s440 = sand.u32 %s30, 1
        %s441 = scalar_lea.sflag [#allocation6], %s440
        %s442 = sand.u32 %s90, 1
        %s443 = smul.addr %s442, 8
        %s444 = scalar_lea.vmem [#allocation7], %s443
        %p445 = pneg %p103
        %p446 = pneg %p100
        %p447 = pneg %p124
        %p448 = pneg %p121
        %p449 = pneg %p145
        %p450 = pneg %p142
        %p451 = pneg %p166
        %p452 = pneg %p163
        %p453 = pneg %p187
        %p454 = pneg %p184
        %p455 = pneg %p208
        %p456 = pneg %p205
        %p457 = pneg %p234
        %p458 = pneg %p231
        %s459 = sand.u32 %s221, 1
        %s460 = scalar_lea.sflag [#allocation4], %s459
        %s461 = sand.u32 %s221, 1
        %s462 = smul.addr %s461, 8
        %s463 = scalar_lea.vmem [#allocation14], %s462
        %v464 = vld [vmem:[%s380] sm:$0xff]
        %v465 = vld [vmem:[%s390] sm:$0xff]
        %v466 = vld [vmem:[%s400] sm:$0xff]
        %v467 = vld [vmem:[#allocation8] sm:$0xff]
        %v468 = vld [vmem:[#allocation8 + $0x8] sm:$0xff]
        %v469 = vld [vmem:[#allocation8 + $0x10] sm:$0xff]
        %v470 = vld [vmem:[#allocation8 + $0x18] sm:$0xff]
        %vm471 = vcmask 261120
        %v473 = vsel %vm471, %v464, 0
        %475 = vmatpush.msra.mxu0 0.0
        %476 = vmatpush.msra.mxu0 0.0
        %477 = vmatpush.msra.mxu0 0.0
        %478 = vmatpush.msra.mxu0 0.0
        %479 = vmatpush.msra.mxu0 0.0
        %480 = vmatpush.msra.mxu0 0.0
        %481 = vmatpush.msra.mxu0 0.0
        %482 = vmatpush.msra.mxu0 0.0
        %483 = vmatpush.msra.mxu0 0.0
        %484 = vmatpush.msra.mxu0 0.0
        %485 = vmatpush.msra.mxu0 0.0
        %486 = vmatpush.msra.mxu0 0.0
        %487 = vmatpush.msra.mxu0 %v470
        %488 = vmatpush.msra.mxu0 %v469
        %489 = vmatpush.msra.mxu0 %v468
        %490 = vmatpush.msra.mxu0 %v467
        %491 = vmatmul.f32.gmra.mxu0 %v473
        %v492 = vpop.f32.mrf.mxu0
        %v493 = vadd.f32 0.0, %v492
        %494 = vdwg.mxu0
        %v495 = vld [vmem:[#allocation10] sm:$0xff]
        %v496 = vld [vmem:[#allocation10 + $0x8] sm:$0xff]
        %v497 = vld [vmem:[#allocation10 + $0x10] sm:$0xff]
        %v498 = vld [vmem:[#allocation10 + $0x18] sm:$0xff]
        %v500 = vsel %vm471, %v465, 0
        %502 = vmatpush.msra.mxu0 0.0
        %503 = vmatpush.msra.mxu0 0.0
        %504 = vmatpush.msra.mxu0 0.0
        %505 = vmatpush.msra.mxu0 0.0
        %506 = vmatpush.msra.mxu0 0.0
        %507 = vmatpush.msra.mxu0 0.0
        %508 = vmatpush.msra.mxu0 0.0
        %509 = vmatpush.msra.mxu0 0.0
        %510 = vmatpush.msra.mxu0 0.0
        %511 = vmatpush.msra.mxu0 0.0
        %512 = vmatpush.msra.mxu0 0.0
        %513 = vmatpush.msra.mxu0 0.0
        %514 = vmatpush.msra.mxu0 %v498
        %515 = vmatpush.msra.mxu0 %v497
        %516 = vmatpush.msra.mxu0 %v496
        %517 = vmatpush.msra.mxu0 %v495
        %518 = vmatmul.f32.gmra.mxu0 %v500
        %v519 = vpop.f32.mrf.mxu0
        %v520 = vadd.f32 0.0, %v519
        %521 = vdwg.mxu0
        %v522 = vld [vmem:[#allocation11] sm:$0xff]
        %v523 = vld [vmem:[#allocation11 + $0x8] sm:$0xff]
        %v524 = vld [vmem:[#allocation11 + $0x10] sm:$0xff]
        %v525 = vld [vmem:[#allocation11 + $0x18] sm:$0xff]
        %v527 = vsel %vm471, %v466, 0
        %529 = vmatpush.msra.mxu0 0.0
        %530 = vmatpush.msra.mxu0 0.0
        %531 = vmatpush.msra.mxu0 0.0
        %532 = vmatpush.msra.mxu0 0.0
        %533 = vmatpush.msra.mxu0 0.0
        %534 = vmatpush.msra.mxu0 0.0
        %535 = vmatpush.msra.mxu0 0.0
        %536 = vmatpush.msra.mxu0 0.0
        %537 = vmatpush.msra.mxu0 0.0
        %538 = vmatpush.msra.mxu0 0.0
        %539 = vmatpush.msra.mxu0 0.0
        %540 = vmatpush.msra.mxu0 0.0
        %541 = vmatpush.msra.mxu0 %v525
        %542 = vmatpush.msra.mxu0 %v524
        %543 = vmatpush.msra.mxu0 %v523
        %544 = vmatpush.msra.mxu0 %v522
        %545 = vmatmul.f32.gmra.mxu0 %v527
        %v546 = vpop.f32.mrf.mxu0
        %v547 = vadd.f32 0.0, %v546
        %548 = vdwg.mxu0
        %vm549 = vcmask 64512
        %v551 = vsel %vm549, %v493, 0
        %v554 = vsel %vm549, %v520, 0
        %556 = vmatpush.xpose.msra.mxu0 0.0
        %557 = vmatpush.xpose.msra.mxu0 0.0
        %558 = vmatpush.xpose.msra.mxu0 0.0
        %559 = vmatpush.xpose.msra.mxu0 0.0
        %560 = vmatpush.xpose.msra.mxu0 0.0
        %561 = vmatpush.xpose.msra.mxu0 0.0
        %562 = vmatpush.xpose.msra.mxu0 0.0
        %563 = vmatpush.xpose.msra.mxu0 0.0
        %564 = vmatpush.xpose.msra.mxu0 0.0
        %565 = vmatpush.xpose.msra.mxu0 0.0
        %566 = vmatpush.xpose.msra.mxu0 0.0
        %567 = vmatpush.xpose.msra.mxu0 0.0
        %568 = vmatpush.xpose.msra.mxu0 0.0
        %569 = vmatpush.xpose.msra.mxu0 0.0
        %570 = vmatpush.xpose.msra.mxu0 0.0
        %571 = vmatpush.xpose.msra.mxu0 %v554
        %572 = vmatmul.f32.gmra.mxu0 %v551
        %v573 = vpop.f32.mrf.mxu0
        %v574 = vadd.f32 0.0, %v573
        %575 = vdwg.mxu0
        %v576 = vsel %vm549, %v574, -inf
        %v577 = vrot.slane %v576, 4
        %v578 = vmax.f32 %v576, %v577
        %v579 = vrot.slane %v578, 2
        %v580 = vmax.f32 %v578, %v579
        %v581 = vrot.slane %v580, 1
        %v582 = vmax.f32 %v580, %v581
        %v583 = vsub.f32 %v574, %v582
        %v584 = vmul.f32 %v583, 1.442695
        %v585 = vpow.pop %v584
        %v586 = vsel %vm549, %v585, 0.0
        %v587 = vrot.slane %v586, 4
        %v588 = vadd.f32 %v586, %v587
        %v589 = vrot.slane %v588, 2
        %v590 = vadd.f32 %v588, %v589
        %v591 = vrot.slane %v590, 1
        %v592 = vadd.f32 %v590, %v591
        %v593 = vrcp.pop %v592
        %v594 = vmul.f32 %v592, %v593
        %v595 = vsub.f32 1.0, %v594
        %v596 = vmul.f32 %v593, %v595
        %v597 = vadd.f32 %v593, %v596
        %vm598 = vweird.f32 %v592
        %vm599 = vweird.f32 %v593
        %vm600 = vmor %vm598, %vm599
        %v601 = vsel %vm600, %v593, %v597
        %v602 = vand.u32 2147483647, %v592
        %vm603 = vcmp.eq.f32.partialorder %v602, 8.507059e+37
        %v604 = vand.u32 %v592, 2147483648
        %v605 = vor.u32 1.1754944e-38, %v604
        %v606 = vsel %vm603, %v605, %v601
        %v607 = vmul.f32 %v585, %v606
        %v609 = vsel %vm549, %v607, 0
        %611 = vmatpush.msra.mxu0 0.0
        %612 = vmatpush.msra.mxu0 0.0
        %613 = vmatpush.msra.mxu0 0.0
        %614 = vmatpush.msra.mxu0 0.0
        %615 = vmatpush.msra.mxu0 0.0
        %616 = vmatpush.msra.mxu0 0.0
        %617 = vmatpush.msra.mxu0 0.0
        %618 = vmatpush.msra.mxu0 0.0
        %619 = vmatpush.msra.mxu0 0.0
        %620 = vmatpush.msra.mxu0 0.0
        %621 = vmatpush.msra.mxu0 0.0
        %622 = vmatpush.msra.mxu0 0.0
        %623 = vmatpush.msra.mxu0 0.0
        %624 = vmatpush.msra.mxu0 0.0
        %625 = vmatpush.msra.mxu0 0.0
        %626 = vmatpush.msra.mxu0 %v547
        %627 = vmatmul.f32.gmra.mxu0 %v609
        %v628 = vpop.f32.mrf.mxu0
        %v629 = vadd.f32 0.0, %v628
        %630 = vdwg.mxu0
        %631 = vrot.lane.b32.xlu0 %v493, 120
        %v632 = vpop.permute.xlu0 %631
        %633 = vrot.lane.b32.xlu0 %v520, 120
        %v634 = vpop.permute.xlu0 %633
        %v635 = vsel %vm549, %v632, 0
        %v637 = vsel %vm549, %v634, 0
        %639 = vmatpush.xpose.msra.mxu0 0.0
        %640 = vmatpush.xpose.msra.mxu0 0.0
        %641 = vmatpush.xpose.msra.mxu0 0.0
        %642 = vmatpush.xpose.msra.mxu0 0.0
        %643 = vmatpush.xpose.msra.mxu0 0.0
        %644 = vmatpush.xpose.msra.mxu0 0.0
        %645 = vmatpush.xpose.msra.mxu0 0.0
        %646 = vmatpush.xpose.msra.mxu0 0.0
        %647 = vmatpush.xpose.msra.mxu0 0.0
        %648 = vmatpush.xpose.msra.mxu0 0.0
        %649 = vmatpush.xpose.msra.mxu0 0.0
        %650 = vmatpush.xpose.msra.mxu0 0.0
        %651 = vmatpush.xpose.msra.mxu0 0.0
        %652 = vmatpush.xpose.msra.mxu0 0.0
        %653 = vmatpush.xpose.msra.mxu0 0.0
        %654 = vmatpush.xpose.msra.mxu0 %v637
        %655 = vmatmul.f32.gmra.mxu0 %v635
        %v656 = vpop.f32.mrf.mxu0
        %v657 = vadd.f32 0.0, %v656
        %658 = vdwg.mxu0
        %v659 = vsel %vm549, %v657, -inf
        %v660 = vrot.slane %v659, 4
        %v661 = vmax.f32 %v659, %v660
        %v662 = vrot.slane %v661, 2
        %v663 = vmax.f32 %v661, %v662
        %v664 = vrot.slane %v663, 1
        %v665 = vmax.f32 %v663, %v664
        %v666 = vsub.f32 %v657, %v665
        %v667 = vmul.f32 %v666, 1.442695
        %v668 = vpow.pop %v667
        %v669 = vsel %vm549, %v668, 0.0
        %v670 = vrot.slane %v669, 4
        %v671 = vadd.f32 %v669, %v670
        %v672 = vrot.slane %v671, 2
        %v673 = vadd.f32 %v671, %v672
        %v674 = vrot.slane %v673, 1
        %v675 = vadd.f32 %v673, %v674
        %v676 = vrcp.pop %v675
        %v677 = vmul.f32 %v675, %v676
        %v678 = vsub.f32 1.0, %v677
        %v679 = vmul.f32 %v676, %v678
        %v680 = vadd.f32 %v676, %v679
        %vm681 = vweird.f32 %v675
        %vm682 = vweird.f32 %v676
        %vm683 = vmor %vm681, %vm682
        %v684 = vsel %vm683, %v676, %v680
        %v685 = vand.u32 2147483647, %v675
        %vm686 = vcmp.eq.f32.partialorder %v685, 8.507059e+37
        %v687 = vand.u32 %v675, 2147483648
        %v688 = vor.u32 1.1754944e-38, %v687
        %v689 = vsel %vm686, %v688, %v684
        %v690 = vmul.f32 %v668, %v689
        %692 = vrot.lane.b32.xlu0 %v547, 120
        %v693 = vpop.permute.xlu0 %692
        %v696 = vsel %vm549, %v690, 0
        %698 = vmatpush.msra.mxu0 0.0
        %699 = vmatpush.msra.mxu0 0.0
        %700 = vmatpush.msra.mxu0 0.0
        %701 = vmatpush.msra.mxu0 0.0
        %702 = vmatpush.msra.mxu0 0.0
        %703 = vmatpush.msra.mxu0 0.0
        %704 = vmatpush.msra.mxu0 0.0
        %705 = vmatpush.msra.mxu0 0.0
        %706 = vmatpush.msra.mxu0 0.0
        %707 = vmatpush.msra.mxu0 0.0
        %708 = vmatpush.msra.mxu0 0.0
        %709 = vmatpush.msra.mxu0 0.0
        %710 = vmatpush.msra.mxu0 0.0
        %711 = vmatpush.msra.mxu0 0.0
        %712 = vmatpush.msra.mxu0 0.0
        %713 = vmatpush.msra.mxu0 %v693
        %714 = vmatmul.f32.gmra.mxu0 %v696
        %v715 = vpop.f32.mrf.mxu0
        %v716 = vadd.f32 0.0, %v715
        %717 = vdwg.mxu0
        %718 = vrot.lane.b32.xlu0 %v493, 112
        %v719 = vpop.permute.xlu0 %718
        %720 = vrot.lane.b32.xlu0 %v520, 112
        %v721 = vpop.permute.xlu0 %720
        %v722 = vsel %vm549, %v719, 0
        %v724 = vsel %vm549, %v721, 0
        %726 = vmatpush.xpose.msra.mxu0 0.0
        %727 = vmatpush.xpose.msra.mxu0 0.0
        %728 = vmatpush.xpose.msra.mxu0 0.0
        %729 = vmatpush.xpose.msra.mxu0 0.0
        %730 = vmatpush.xpose.msra.mxu0 0.0
        %731 = vmatpush.xpose.msra.mxu0 0.0
        %732 = vmatpush.xpose.msra.mxu0 0.0
        %733 = vmatpush.xpose.msra.mxu0 0.0
        %734 = vmatpush.xpose.msra.mxu0 0.0
        %735 = vmatpush.xpose.msra.mxu0 0.0
        %736 = vmatpush.xpose.msra.mxu0 0.0
        %737 = vmatpush.xpose.msra.mxu0 0.0
        %738 = vmatpush.xpose.msra.mxu0 0.0
        %739 = vmatpush.xpose.msra.mxu0 0.0
        %740 = vmatpush.xpose.msra.mxu0 0.0
        %741 = vmatpush.xpose.msra.mxu0 %v724
        %742 = vmatmul.f32.gmra.mxu0 %v722
        %v743 = vpop.f32.mrf.mxu0
        %v744 = vadd.f32 0.0, %v743
        %745 = vdwg.mxu0
        %v746 = vsel %vm549, %v744, -inf
        %v747 = vrot.slane %v746, 4
        %v748 = vmax.f32 %v746, %v747
        %v749 = vrot.slane %v748, 2
        %v750 = vmax.f32 %v748, %v749
        %v751 = vrot.slane %v750, 1
        %v752 = vmax.f32 %v750, %v751
        %v753 = vsub.f32 %v744, %v752
        %v754 = vmul.f32 %v753, 1.442695
        %v755 = vpow.pop %v754
        %v756 = vsel %vm549, %v755, 0.0
        %v757 = vrot.slane %v756, 4
        %v758 = vadd.f32 %v756, %v757
        %v759 = vrot.slane %v758, 2
        %v760 = vadd.f32 %v758, %v759
        %v761 = vrot.slane %v760, 1
        %v762 = vadd.f32 %v760, %v761
        %v763 = vrcp.pop %v762
        %v764 = vmul.f32 %v762, %v763
        %v765 = vsub.f32 1.0, %v764
        %v766 = vmul.f32 %v763, %v765
        %v767 = vadd.f32 %v763, %v766
        %vm768 = vweird.f32 %v762
        %vm769 = vweird.f32 %v763
        %vm770 = vmor %vm768, %vm769
        %v771 = vsel %vm770, %v763, %v767
        %v772 = vand.u32 2147483647, %v762
        %vm773 = vcmp.eq.f32.partialorder %v772, 8.507059e+37
        %v774 = vand.u32 %v762, 2147483648
        %v775 = vor.u32 1.1754944e-38, %v774
        %v776 = vsel %vm773, %v775, %v771
        %v777 = vmul.f32 %v755, %v776
        %778 = vrot.lane.b32.xlu0 %v547, 112
        %v779 = vpop.permute.xlu0 %778
        %v782 = vsel %vm549, %v777, 0
        %784 = vmatpush.msra.mxu0 0.0
        %785 = vmatpush.msra.mxu0 0.0
        %786 = vmatpush.msra.mxu0 0.0
        %787 = vmatpush.msra.mxu0 0.0
        %788 = vmatpush.msra.mxu0 0.0
        %789 = vmatpush.msra.mxu0 0.0
        %790 = vmatpush.msra.mxu0 0.0
        %791 = vmatpush.msra.mxu0 0.0
        %792 = vmatpush.msra.mxu0 0.0
        %793 = vmatpush.msra.mxu0 0.0
        %794 = vmatpush.msra.mxu0 0.0
        %795 = vmatpush.msra.mxu0 0.0
        %796 = vmatpush.msra.mxu0 0.0
        %797 = vmatpush.msra.mxu0 0.0
        %798 = vmatpush.msra.mxu0 0.0
        %799 = vmatpush.msra.mxu0 %v779
        %800 = vmatmul.f32.gmra.mxu0 %v782
        %v801 = vpop.f32.mrf.mxu0
        %v802 = vadd.f32 0.0, %v801
        %803 = vdwg.mxu0
        %804 = vrot.lane.b32.xlu0 %v493, 104
        %v805 = vpop.permute.xlu0 %804
        %806 = vrot.lane.b32.xlu0 %v520, 104
        %v807 = vpop.permute.xlu0 %806
        %v808 = vsel %vm549, %v805, 0
        %v810 = vsel %vm549, %v807, 0
        %812 = vmatpush.xpose.msra.mxu0 0.0
        %813 = vmatpush.xpose.msra.mxu0 0.0
        %814 = vmatpush.xpose.msra.mxu0 0.0
        %815 = vmatpush.xpose.msra.mxu0 0.0
        %816 = vmatpush.xpose.msra.mxu0 0.0
        %817 = vmatpush.xpose.msra.mxu0 0.0
        %818 = vmatpush.xpose.msra.mxu0 0.0
        %819 = vmatpush.xpose.msra.mxu0 0.0
        %820 = vmatpush.xpose.msra.mxu0 0.0
        %821 = vmatpush.xpose.msra.mxu0 0.0
        %822 = vmatpush.xpose.msra.mxu0 0.0
        %823 = vmatpush.xpose.msra.mxu0 0.0
        %824 = vmatpush.xpose.msra.mxu0 0.0
        %825 = vmatpush.xpose.msra.mxu0 0.0
        %826 = vmatpush.xpose.msra.mxu0 0.0
        %827 = vmatpush.xpose.msra.mxu0 %v810
        %828 = vmatmul.f32.gmra.mxu0 %v808
        %v829 = vpop.f32.mrf.mxu0
        %v830 = vadd.f32 0.0, %v829
        %831 = vdwg.mxu0
        %v832 = vsel %vm549, %v830, -inf
        %v833 = vrot.slane %v832, 4
        %v834 = vmax.f32 %v832, %v833
        %v835 = vrot.slane %v834, 2
        %v836 = vmax.f32 %v834, %v835
        %v837 = vrot.slane %v836, 1
        %v838 = vmax.f32 %v836, %v837
        %v839 = vsub.f32 %v830, %v838
        %v840 = vmul.f32 %v839, 1.442695
        %v841 = vpow.pop %v840
        %v842 = vsel %vm549, %v841, 0.0
        %v843 = vrot.slane %v842, 4
        %v844 = vadd.f32 %v842, %v843
        %v845 = vrot.slane %v844, 2
        %v846 = vadd.f32 %v844, %v845
        %v847 = vrot.slane %v846, 1
        %v848 = vadd.f32 %v846, %v847
        %v849 = vrcp.pop %v848
        %v850 = vmul.f32 %v848, %v849
        %v851 = vsub.f32 1.0, %v850
        %v852 = vmul.f32 %v849, %v851
        %v853 = vadd.f32 %v849, %v852
        %vm854 = vweird.f32 %v848
        %vm855 = vweird.f32 %v849
        %vm856 = vmor %vm854, %vm855
        %v857 = vsel %vm856, %v849, %v853
        %v858 = vand.u32 2147483647, %v848
        %vm859 = vcmp.eq.f32.partialorder %v858, 8.507059e+37
        %v860 = vand.u32 %v848, 2147483648
        %v861 = vor.u32 1.1754944e-38, %v860
        %v862 = vsel %vm859, %v861, %v857
        %v863 = vmul.f32 %v841, %v862
        %864 = vrot.lane.b32.xlu0 %v547, 104
        %v865 = vpop.permute.xlu0 %864
        %v868 = vsel %vm549, %v863, 0
        %870 = vmatpush.msra.mxu0 0.0
        %871 = vmatpush.msra.mxu0 0.0
        %872 = vmatpush.msra.mxu0 0.0
        %873 = vmatpush.msra.mxu0 0.0
        %874 = vmatpush.msra.mxu0 0.0
        %875 = vmatpush.msra.mxu0 0.0
        %876 = vmatpush.msra.mxu0 0.0
        %877 = vmatpush.msra.mxu0 0.0
        %878 = vmatpush.msra.mxu0 0.0
        %879 = vmatpush.msra.mxu0 0.0
        %880 = vmatpush.msra.mxu0 0.0
        %881 = vmatpush.msra.mxu0 0.0
        %882 = vmatpush.msra.mxu0 0.0
        %883 = vmatpush.msra.mxu0 0.0
        %884 = vmatpush.msra.mxu0 0.0
        %885 = vmatpush.msra.mxu0 %v865
        %886 = vmatmul.f32.gmra.mxu0 %v868
        %v887 = vpop.f32.mrf.mxu0
        %v888 = vadd.f32 0.0, %v887
        %889 = vdwg.mxu0
        %891 = vrot.lane.b32.xlu0 %v716, 8
        %v892 = vpop.permute.xlu0 %891
        %895 = vrot.lane.b32.xlu0 %v802, 16
        %v896 = vpop.permute.xlu0 %895
        %899 = vrot.lane.b32.xlu0 %v888, 24
        %v900 = vpop.permute.xlu0 %899
        %v902 = vsel %vm549, %v629, %v892
        %vm903 = vcmask 130048
        %v904 = vsel %vm903, %v902, %v896
        %vm905 = vcmask 195584
        %v906 = vsel %vm905, %v904, %v900
        %v907 = vld [vmem:[#allocation13] sm:$0xff]
        %v908 = vld [vmem:[#allocation13 + $0x8] sm:$0xff]
        %v909 = vld [vmem:[#allocation13 + $0x10] sm:$0xff]
        %v910 = vld [vmem:[#allocation13 + $0x18] sm:$0xff]
        %v911 = vld [vmem:[%s7] sm:$0x1]
        %v913 = vperm.slane %v911, 0
        %v916 = vsel %vm471, %v906, 0
        %918 = vmatpush.msra.mxu0 0.0
        %919 = vmatpush.msra.mxu0 0.0
        %920 = vmatpush.msra.mxu0 0.0
        %921 = vmatpush.msra.mxu0 0.0
        %922 = vmatpush.msra.mxu0 0.0
        %923 = vmatpush.msra.mxu0 0.0
        %924 = vmatpush.msra.mxu0 0.0
        %925 = vmatpush.msra.mxu0 0.0
        %926 = vmatpush.msra.mxu0 0.0
        %927 = vmatpush.msra.mxu0 0.0
        %928 = vmatpush.msra.mxu0 0.0
        %929 = vmatpush.msra.mxu0 0.0
        %930 = vmatpush.msra.mxu0 %v910
        %931 = vmatpush.msra.mxu0 %v909
        %932 = vmatpush.msra.mxu0 %v908
        %933 = vmatpush.msra.mxu0 %v907
        %934 = vmatmul.f32.gmra.mxu0 %v916
        %v935 = vpop.f32.mrf.mxu0
        %v936 = vadd.f32 %v913, %v935
        %937 = vdwg.mxu0
        %938 = vst.msk [vmem:[%s463] sm:$0xff] %vm471, %v936
        %s939 = sand.u32 %s221, 1
        %s940 = scalar_lea.sflag [#allocation4], %s939
        %s941 = sand.u32 %s221, 1
        %s942 = smul.addr %s941, 8
        %s943 = scalar_lea.vmem [#allocation14], %s942
        // Predicated region
        $region81: #{tpu_custom_call.1} parent=51 // pred_check
          %p944 = pneg %p231
        $region82: #{tpu_custom_call.1} parent=51 // pred_check_branch
          %946 = sbr.rel (%p944) target = $region84
        $region83: #{tpu_custom_call.1} parent=51 // pred_region
          %948 = vsyncadd %s940, 0
          %s949 = smul.addr %s30, 8
          %s950 = scalar_lea.hbm %s8, %s949
          %s952 = sshll.u32 %s943, 4
          %s953 = int_to_ptr.vmem [resolvable:$true] %s952
          %s954 = sshll.u32 %s950, 4
          %s955 = int_to_ptr.hbm [resolvable:$true] %s954
          %957 = dma.vmem_to_hbm [thread:$0]  %s953, 128, %s955, %s940
        $region84: #{tpu_custom_call.1} parent=51 // pred_fallthru
          _
      $region52: #{tpu_custom_call.1} parent=5 // pred_fallthru
        _
      %p958 = scmp.le.s32.totalorder 2, %s25
      // Predicated region
      $region85: #{tpu_custom_call.1} parent=5 // pred_check
        %p959 = pneg %p958
      $region86: #{tpu_custom_call.1} parent=5 // pred_check_branch
        %961 = sbr.rel (%p959) target = $region88
      $region87: #{tpu_custom_call.1} parent=5 // pred_region
        %s962 = ssub.s32 %s25, 2
        // Predicated region
        $region89: #{tpu_custom_call.1} parent=87 // pred_check
          %p963 = pneg %p237
        $region90: #{tpu_custom_call.1} parent=87 // pred_check_branch
          %965 = sbr.rel (%p963) target = $region92
        $region91: #{tpu_custom_call.1} parent=87 // pred_region
          %s966 = sand.u32 %s222, 1
          %s967 = scalar_lea.sflag [#allocation4], %s966
          %s968 = sand.u32 %s222, 1
          %s969 = smul.addr %s968, 8
          %s970 = scalar_lea.vmem [#allocation14], %s969
          %972 = dma.done %s967, 128
        $region92: #{tpu_custom_call.1} parent=87 // pred_fallthru
          _
      $region88: #{tpu_custom_call.1} parent=5 // pred_fallthru
        _
    $region6: #{tpu_custom_call.1} parent=1 // loop_footer
      %s29 = sadd.s32 1, %s25
    $region7: #{tpu_custom_call.1} parent=1 // loop_footer_branch
      %24 = sbr.rel target = $region3
    $region8: #{tpu_custom_call.1} parent=1 // loop_exit
      _
    %973 = vsyncpa [#allocation3], 1
    %s974 = scalar_lea.sflag [#allocation3], 1
    %975 = vsyncpa %s974, 1
    %976 = vsyncpa [#allocation6], 1
    %s977 = scalar_lea.sflag [#allocation6], 1
    %978 = vsyncpa %s977, 1
    %979 = vsyncpa [#allocation9], 1
    %980 = vsyncpa [#allocation12], 1
    %981 = vsyncpa [#allocation4], 1
    %s982 = scalar_lea.sflag [#allocation4], 1
    %983 = vsyncpa %s982, 1

</llo_original>
